<compile_context>
chip_gen: v5e
topology: v5e:2x2
jax: 0.10.0
libtpu: 0.0.40
codegen_flags: <defaults>
</compile_context>

<pallas_src>
import jax
import jax.numpy as jnp
import numpy as np
from jax.experimental import pallas as pl
from jax.experimental.pallas import tpu as pltpu


def _lstm_kernel(x_ref, wih_ref, whh_ref, b_ref, fcw_ref, fcb_ref, out_ref, xg_ref):
    SB, D = x_ref.shape
    S, B = out_ref.shape
    H = whh_ref.shape[0]

    # ---- Phase 1: input projection for ALL timesteps (one MXU push, off the serial path).
    xg_ref[...] = (jnp.dot(x_ref[...], wih_ref[...],
                           preferred_element_type=jnp.float32)
                   + b_ref[...])                                            # (S*B, 4H)

    # Hoist loop-invariant operands out of the recurrence.
    whh = whh_ref[...]                                                      # (H, 4H)
    fcw = fcw_ref[...]                                                      # (1, H)
    fcb = fcb_ref[0, 0]                                                     # scalar

    # ---- Phase 2: sequential recurrence; h/c live in registers (fori_loop carry).
    def step(t, carry):
        h_prev, c_prev = carry                                              # (B, H) each
        off = pl.multiple_of(t * B, B)
        # Only the h-side matmul remains on the serial critical path.
        gates = xg_ref[pl.ds(off, B), :] + jnp.dot(
            h_prev, whh, preferred_element_type=jnp.float32)                # (B, 4H)
        # Gate columns pre-permuted to (i, f, o, g): one sigmoid, one tanh.
        sig = jax.nn.sigmoid(gates[:, :3 * H])
        i_g = sig[:, 0 * H:1 * H]
        f_g = sig[:, 1 * H:2 * H]
        o_g = sig[:, 2 * H:3 * H]
        g_g = jnp.tanh(gates[:, 3 * H:])
        c_new = f_g * c_prev + i_g * g_g
        h_new = o_g * jnp.tanh(c_new)
        # Fused Linear(H, 1): VPU multiply + lane reduce (XLU slot), single tiny store.
        out_ref[t] = jnp.sum(h_new * fcw, axis=-1) + fcb
        return (h_new, c_new)

    h0 = jnp.zeros((B, H), jnp.float32)
    c0 = jnp.zeros((B, H), jnp.float32)
    jax.lax.fori_loop(0, S, step, (h0, c0), unroll=True)


@jax.jit
def lstm_net_forward(x, w_ih, w_hh, b_ih, b_hh, fc_w, fc_b):
    """x: (S, B, D) float32. Returns (S, B, 1) float32."""
    S, B, D = x.shape
    H = w_hh.shape[1]

    # Pre-transpose / fold / permute params in plain JAX (glue, not hot path).
    # PyTorch gate row order is (i, f, g, o); permute to (i, f, o, g) so the kernel can
    # apply one sigmoid over the first 3H columns and one tanh over the last H.
    def permute_gates(w):  # permutes along the leading 4H axis
        return jnp.concatenate([w[:2 * H], w[3 * H:4 * H], w[2 * H:3 * H]], axis=0)

    wih_t = permute_gates(w_ih).T                          # (D, 4H)
    whh_t = permute_gates(w_hh).T                          # (H, 4H)
    bias = permute_gates(b_ih + b_hh).reshape(1, 4 * H)    # (1, 4H)
    fcw = fc_w.reshape(1, H)                               # (1, H)
    fcb = fc_b.reshape(1, 1)                               # (1, 1)
    x2d = x.reshape(S * B, D)                              # reshape outside the kernel

    out2d = pl.pallas_call(
        _lstm_kernel,
        out_shape=jax.ShapeDtypeStruct((S, B), jnp.float32),
        in_specs=[
            pl.BlockSpec((S * B, D), lambda: (0, 0)),      # x, time-major rows
            pl.BlockSpec((D, 4 * H), lambda: (0, 0)),      # W_ih^T (permuted)
            pl.BlockSpec((H, 4 * H), lambda: (0, 0)),      # W_hh^T (permuted)
            pl.BlockSpec((1, 4 * H), lambda: (0, 0)),      # folded, permuted bias
            pl.BlockSpec((1, H), lambda: (0, 0)),          # fc weight row
            pl.BlockSpec((1, 1), lambda: (0, 0)),          # fc bias
        ],
        out_specs=pl.BlockSpec((S, B), lambda: (0, 0)),
        scratch_shapes=[
            pltpu.VMEM((S * B, 4 * H), jnp.float32),       # precomputed x-side gates
        ],
    )(x2d, wih_t, whh_t, bias, fcw, fcb)

    return out2d[..., None]                                # (S, B, 1)


def _reference(x, w_ih, w_hh, b_ih, b_hh, fc_w, fc_b):
    """Pure-JAX reference mirroring torch.nn.LSTM + Linear (gate order i, f, g, o)."""
    S, B, D = x.shape
    H = w_hh.shape[1]

    def step(carry, x_t):
        h, c = carry
        gates = x_t @ w_ih.T + h @ w_hh.T + b_ih + b_hh
        i = jax.nn.sigmoid(gates[:, 0 * H:1 * H])
        f = jax.nn.sigmoid(gates[:, 1 * H:2 * H])
        g = jnp.tanh(gates[:, 2 * H:3 * H])
        o = jax.nn.sigmoid(gates[:, 3 * H:4 * H])
        c = f * c + i * g
        h = o * jnp.tanh(c)
        return (h, c), h

    h0 = jnp.zeros((B, H), jnp.float32)
    c0 = jnp.zeros((B, H), jnp.float32)
    _, hs = jax.lax.scan(step, (h0, c0), x)                # (S, B, H)
    return hs @ fc_w.T + fc_b                              # (S, B, 1)


if __name__ == "__main__":
    # Small shapes consistent with the module: seq=8, batch=2, input_size=16, hidden=32.
    S, B, D, H = 8, 2, 16, 32

    key = jax.random.PRNGKey(0)
    kx, k1, k2, k3, k4, k5, k6 = jax.random.split(key, 7)

    # Deterministic init, PyTorch-style U(-1/sqrt(H), 1/sqrt(H)).
    bound = 1.0 / np.sqrt(H)
    w_ih = jax.random.uniform(k1, (4 * H, D), jnp.float32, -bound, bound)
    w_hh = jax.random.uniform(k2, (4 * H, H), jnp.float32, -bound, bound)
    b_ih = jax.random.uniform(k3, (4 * H,), jnp.float32, -bound, bound)
    b_hh = jax.random.uniform(k4, (4 * H,), jnp.float32, -bound, bound)
    fc_w = jax.random.uniform(k5, (1, H), jnp.float32, -bound, bound)
    fc_b = jax.random.uniform(k6, (1,), jnp.float32, -bound, bound)

    x = jax.random.normal(kx, (S, B, D), jnp.float32)

    out = lstm_net_forward(x, w_ih, w_hh, b_ih, b_hh, fc_w, fc_b)
    out = jax.block_until_ready(out)

    ref = _reference(x, w_ih, w_hh, b_ih, b_hh, fc_w, fc_b)
    assert out.shape == (S, B, 1)
    np.testing.assert_allclose(np.asarray(out), np.asarray(ref), rtol=1e-5, atol=1e-5)

    print("KERNEL_OK")
</pallas_src>

<mosaic_0001>
module attributes {stable_mosaic.version = 11 : i64} {
  func.func @_lstm_kernel(%arg0: memref<16x16xf32, #tpu.memory_space<vmem>>, %arg1: memref<16x128xf32, #tpu.memory_space<vmem>>, %arg2: memref<32x128xf32, #tpu.memory_space<vmem>>, %arg3: memref<1x128xf32, #tpu.memory_space<vmem>>, %arg4: memref<1x32xf32, #tpu.memory_space<vmem>>, %arg5: memref<1x1xf32, #tpu.memory_space<vmem>>, %arg6: memref<8x2xf32, #tpu.memory_space<vmem>>, %arg7: memref<16x128xf32, #tpu.memory_space<vmem>>) attributes {dimension_semantics = [], scalar_prefetch = 0 : i64, scratch_operands = 1 : i64, tpu.core_type = #tpu.core_type<tc>} {
    %c0 = arith.constant 0 : index
    %c0_0 = arith.constant 0 : index
    %0 = vector.load %arg0[%c0, %c0_0] : memref<16x16xf32, #tpu.memory_space<vmem>>, vector<16x16xf32>
    %c0_1 = arith.constant 0 : index
    %c0_2 = arith.constant 0 : index
    %1 = vector.load %arg1[%c0_1, %c0_2] : memref<16x128xf32, #tpu.memory_space<vmem>>, vector<16x128xf32>
    %cst = arith.constant dense<0.000000e+00> : vector<16x128xf32>
    %2 = tpu.matmul %0, %1, %cst {dimension_numbers = #tpu.dot_dimension_numbers<[1], [0], [0], [1], [0, 0, 1, 1], [], []>} : vector<16x16xf32>, vector<16x128xf32>, vector<16x128xf32> -> vector<16x128xf32>
    %c0_3 = arith.constant 0 : index
    %c0_4 = arith.constant 0 : index
    %3 = vector.load %arg3[%c0_3, %c0_4] : memref<1x128xf32, #tpu.memory_space<vmem>>, vector<1x128xf32>
    %4 = vector.broadcast %3 : vector<1x128xf32> to vector<16x128xf32>
    %5 = arith.addf %2, %4 : vector<16x128xf32>
    %c0_5 = arith.constant 0 : index
    %c0_6 = arith.constant 0 : index
    %6 = vector.load %arg7[%c0_5, %c0_6] : memref<16x128xf32, #tpu.memory_space<vmem>>, vector<16x128xf32>
    tpu.vector_store %arg7[%c0_5, %c0_6], %5 {strides = array<i32>} : memref<16x128xf32, #tpu.memory_space<vmem>>, vector<16x128xf32>,
    %c0_7 = arith.constant 0 : index
    %c0_8 = arith.constant 0 : index
    %7 = vector.load %arg2[%c0_7, %c0_8] : memref<32x128xf32, #tpu.memory_space<vmem>>, vector<32x128xf32>
    %c0_9 = arith.constant 0 : index
    %c0_10 = arith.constant 0 : index
    %8 = vector.load %arg4[%c0_9, %c0_10] : memref<1x32xf32, #tpu.memory_space<vmem>>, vector<1x32xf32>
    %c0_11 = arith.constant 0 : index
    %c0_12 = arith.constant 0 : index
    %9 = vector.load %arg5[%c0_11, %c0_12] : memref<1x1xf32, #tpu.memory_space<vmem>>, vector<1x1xf32>
    %10 = vector.extract %9[0, 0] : f32 from vector<1x1xf32>
    %cst_13 = arith.constant 0.000000e+00 : f32
    %11 = vector.broadcast %cst_13 : f32 to vector<2x32xf32>
    %cst_14 = arith.constant 0.000000e+00 : f32
    %12 = vector.broadcast %cst_14 : f32 to vector<2x32xf32>
    %c0_i32 = arith.constant 0 : i32
    %c2_i32 = arith.constant 2 : i32
    %13 = arith.muli %c0_i32, %c2_i32 : i32
    %14 = tpu.assume_multiple %13, 2 : i32
    %15 = arith.index_cast %14 : i32 to index
    %c0_15 = arith.constant 0 : index
    %16 = vector.load %arg7[%15, %c0_15] : memref<16x128xf32, #tpu.memory_space<vmem>>, vector<2x128xf32>
    %cst_16 = arith.constant dense<0.000000e+00> : vector<2x128xf32>
    %17 = tpu.matmul %11, %7, %cst_16 {dimension_numbers = #tpu.dot_dimension_numbers<[1], [0], [0], [1], [0, 0, 1, 1], [], []>} : vector<2x32xf32>, vector<32x128xf32>, vector<2x128xf32> -> vector<2x128xf32>
    %18 = arith.addf %16, %17 : vector<2x128xf32>
    %19 = vector.extract_strided_slice %18 {offsets = [0, 0], sizes = [2, 96], strides = [1, 1]} : vector<2x128xf32> to vector<2x96xf32>
    %20 = arith.negf %19 : vector<2x96xf32>
    %21 = math.exp %20 : vector<2x96xf32>
    %cst_17 = arith.constant 1.000000e+00 : f32
    %22 = vector.broadcast %cst_17 : f32 to vector<2x96xf32>
    %23 = arith.addf %22, %21 : vector<2x96xf32>
    %24 = arith.divf %22, %23 : vector<2x96xf32>
    %25 = vector.extract_strided_slice %24 {offsets = [0, 0], sizes = [2, 32], strides = [1, 1]} : vector<2x96xf32> to vector<2x32xf32>
    %26 = vector.extract_strided_slice %24 {offsets = [0, 32], sizes = [2, 32], strides = [1, 1]} : vector<2x96xf32> to vector<2x32xf32>
    %27 = vector.extract_strided_slice %24 {offsets = [0, 64], sizes = [2, 32], strides = [1, 1]} : vector<2x96xf32> to vector<2x32xf32>
    %28 = vector.extract_strided_slice %18 {offsets = [0, 96], sizes = [2, 32], strides = [1, 1]} : vector<2x128xf32> to vector<2x32xf32>
    %29 = math.tanh %28 : vector<2x32xf32>
    %30 = arith.mulf %26, %12 : vector<2x32xf32>
    %31 = arith.mulf %25, %29 : vector<2x32xf32>
    %32 = arith.addf %30, %31 : vector<2x32xf32>
    %33 = math.tanh %32 : vector<2x32xf32>
    %34 = arith.mulf %27, %33 : vector<2x32xf32>
    %35 = vector.broadcast %8 : vector<1x32xf32> to vector<2x32xf32>
    %36 = arith.mulf %34, %35 : vector<2x32xf32>
    %cst_18 = arith.constant dense<0.000000e+00> : vector<2xf32>
    %37 = vector.multi_reduction <add>, %36, %cst_18 [1] : vector<2x32xf32> to vector<2xf32>
    %38 = vector.broadcast %10 : f32 to vector<2xf32>
    %39 = arith.addf %37, %38 : vector<2xf32>
    %40 = arith.index_cast %c0_i32 : i32 to index
    %c0_19 = arith.constant 0 : index
    %41 = vector.load %arg6[%40, %c0_19] : memref<8x2xf32, #tpu.memory_space<vmem>>, vector<1x2xf32>
    %42 = vector.shape_cast %41 : vector<1x2xf32> to vector<2xf32>
    %43 = vector.shape_cast %39 : vector<2xf32> to vector<1x2xf32>
    tpu.vector_store %arg6[%40, %c0_19], %43 {strides = array<i32>} : memref<8x2xf32, #tpu.memory_space<vmem>>, vector<1x2xf32>,
    %c1_i32 = arith.constant 1 : i32
    %c2_i32_20 = arith.constant 2 : i32
    %44 = arith.muli %c1_i32, %c2_i32_20 : i32
    %45 = tpu.assume_multiple %44, 2 : i32
    %46 = arith.index_cast %45 : i32 to index
    %c0_21 = arith.constant 0 : index
    %47 = vector.load %arg7[%46, %c0_21] : memref<16x128xf32, #tpu.memory_space<vmem>>, vector<2x128xf32>
    %cst_22 = arith.constant dense<0.000000e+00> : vector<2x128xf32>
    %48 = tpu.matmul %34, %7, %cst_22 {dimension_numbers = #tpu.dot_dimension_numbers<[1], [0], [0], [1], [0, 0, 1, 1], [], []>} : vector<2x32xf32>, vector<32x128xf32>, vector<2x128xf32> -> vector<2x128xf32>
    %49 = arith.addf %47, %48 : vector<2x128xf32>
    %50 = vector.extract_strided_slice %49 {offsets = [0, 0], sizes = [2, 96], strides = [1, 1]} : vector<2x128xf32> to vector<2x96xf32>
    %51 = arith.negf %50 : vector<2x96xf32>
    %52 = math.exp %51 : vector<2x96xf32>
    %cst_23 = arith.constant 1.000000e+00 : f32
    %53 = vector.broadcast %cst_23 : f32 to vector<2x96xf32>
    %54 = arith.addf %53, %52 : vector<2x96xf32>
    %55 = arith.divf %53, %54 : vector<2x96xf32>
    %56 = vector.extract_strided_slice %55 {offsets = [0, 0], sizes = [2, 32], strides = [1, 1]} : vector<2x96xf32> to vector<2x32xf32>
    %57 = vector.extract_strided_slice %55 {offsets = [0, 32], sizes = [2, 32], strides = [1, 1]} : vector<2x96xf32> to vector<2x32xf32>
    %58 = vector.extract_strided_slice %55 {offsets = [0, 64], sizes = [2, 32], strides = [1, 1]} : vector<2x96xf32> to vector<2x32xf32>
    %59 = vector.extract_strided_slice %49 {offsets = [0, 96], sizes = [2, 32], strides = [1, 1]} : vector<2x128xf32> to vector<2x32xf32>
    %60 = math.tanh %59 : vector<2x32xf32>
    %61 = arith.mulf %57, %32 : vector<2x32xf32>
    %62 = arith.mulf %56, %60 : vector<2x32xf32>
    %63 = arith.addf %61, %62 : vector<2x32xf32>
    %64 = math.tanh %63 : vector<2x32xf32>
    %65 = arith.mulf %58, %64 : vector<2x32xf32>
    %66 = vector.broadcast %8 : vector<1x32xf32> to vector<2x32xf32>
    %67 = arith.mulf %65, %66 : vector<2x32xf32>
    %cst_24 = arith.constant dense<0.000000e+00> : vector<2xf32>
    %68 = vector.multi_reduction <add>, %67, %cst_24 [1] : vector<2x32xf32> to vector<2xf32>
    %69 = vector.broadcast %10 : f32 to vector<2xf32>
    %70 = arith.addf %68, %69 : vector<2xf32>
    %71 = arith.index_cast %c1_i32 : i32 to index
    %c0_25 = arith.constant 0 : index
    %72 = vector.load %arg6[%71, %c0_25] : memref<8x2xf32, #tpu.memory_space<vmem>>, vector<1x2xf32>
    %73 = vector.shape_cast %72 : vector<1x2xf32> to vector<2xf32>
    %74 = vector.shape_cast %70 : vector<2xf32> to vector<1x2xf32>
    tpu.vector_store %arg6[%71, %c0_25], %74 {strides = array<i32>} : memref<8x2xf32, #tpu.memory_space<vmem>>, vector<1x2xf32>,
    %c2_i32_26 = arith.constant 2 : i32
    %c2_i32_27 = arith.constant 2 : i32
    %75 = arith.muli %c2_i32_26, %c2_i32_27 : i32
    %76 = tpu.assume_multiple %75, 2 : i32
    %77 = arith.index_cast %76 : i32 to index
    %c0_28 = arith.constant 0 : index
    %78 = vector.load %arg7[%77, %c0_28] : memref<16x128xf32, #tpu.memory_space<vmem>>, vector<2x128xf32>
    %cst_29 = arith.constant dense<0.000000e+00> : vector<2x128xf32>
    %79 = tpu.matmul %65, %7, %cst_29 {dimension_numbers = #tpu.dot_dimension_numbers<[1], [0], [0], [1], [0, 0, 1, 1], [], []>} : vector<2x32xf32>, vector<32x128xf32>, vector<2x128xf32> -> vector<2x128xf32>
    %80 = arith.addf %78, %79 : vector<2x128xf32>
    %81 = vector.extract_strided_slice %80 {offsets = [0, 0], sizes = [2, 96], strides = [1, 1]} : vector<2x128xf32> to vector<2x96xf32>
    %82 = arith.negf %81 : vector<2x96xf32>
    %83 = math.exp %82 : vector<2x96xf32>
    %cst_30 = arith.constant 1.000000e+00 : f32
    %84 = vector.broadcast %cst_30 : f32 to vector<2x96xf32>
    %85 = arith.addf %84, %83 : vector<2x96xf32>
    %86 = arith.divf %84, %85 : vector<2x96xf32>
    %87 = vector.extract_strided_slice %86 {offsets = [0, 0], sizes = [2, 32], strides = [1, 1]} : vector<2x96xf32> to vector<2x32xf32>
    %88 = vector.extract_strided_slice %86 {offsets = [0, 32], sizes = [2, 32], strides = [1, 1]} : vector<2x96xf32> to vector<2x32xf32>
    %89 = vector.extract_strided_slice %86 {offsets = [0, 64], sizes = [2, 32], strides = [1, 1]} : vector<2x96xf32> to vector<2x32xf32>
    %90 = vector.extract_strided_slice %80 {offsets = [0, 96], sizes = [2, 32], strides = [1, 1]} : vector<2x128xf32> to vector<2x32xf32>
    %91 = math.tanh %90 : vector<2x32xf32>
    %92 = arith.mulf %88, %63 : vector<2x32xf32>
    %93 = arith.mulf %87, %91 : vector<2x32xf32>
    %94 = arith.addf %92, %93 : vector<2x32xf32>
    %95 = math.tanh %94 : vector<2x32xf32>
    %96 = arith.mulf %89, %95 : vector<2x32xf32>
    %97 = vector.broadcast %8 : vector<1x32xf32> to vector<2x32xf32>
    %98 = arith.mulf %96, %97 : vector<2x32xf32>
    %cst_31 = arith.constant dense<0.000000e+00> : vector<2xf32>
    %99 = vector.multi_reduction <add>, %98, %cst_31 [1] : vector<2x32xf32> to vector<2xf32>
    %100 = vector.broadcast %10 : f32 to vector<2xf32>
    %101 = arith.addf %99, %100 : vector<2xf32>
    %102 = arith.index_cast %c2_i32_26 : i32 to index
    %c0_32 = arith.constant 0 : index
    %103 = vector.load %arg6[%102, %c0_32] : memref<8x2xf32, #tpu.memory_space<vmem>>, vector<1x2xf32>
    %104 = vector.shape_cast %103 : vector<1x2xf32> to vector<2xf32>
    %105 = vector.shape_cast %101 : vector<2xf32> to vector<1x2xf32>
    tpu.vector_store %arg6[%102, %c0_32], %105 {strides = array<i32>} : memref<8x2xf32, #tpu.memory_space<vmem>>, vector<1x2xf32>,
    %c3_i32 = arith.constant 3 : i32
    %c2_i32_33 = arith.constant 2 : i32
    %106 = arith.muli %c3_i32, %c2_i32_33 : i32
    %107 = tpu.assume_multiple %106, 2 : i32
    %108 = arith.index_cast %107 : i32 to index
    %c0_34 = arith.constant 0 : index
    %109 = vector.load %arg7[%108, %c0_34] : memref<16x128xf32, #tpu.memory_space<vmem>>, vector<2x128xf32>
    %cst_35 = arith.constant dense<0.000000e+00> : vector<2x128xf32>
    %110 = tpu.matmul %96, %7, %cst_35 {dimension_numbers = #tpu.dot_dimension_numbers<[1], [0], [0], [1], [0, 0, 1, 1], [], []>} : vector<2x32xf32>, vector<32x128xf32>, vector<2x128xf32> -> vector<2x128xf32>
    %111 = arith.addf %109, %110 : vector<2x128xf32>
    %112 = vector.extract_strided_slice %111 {offsets = [0, 0], sizes = [2, 96], strides = [1, 1]} : vector<2x128xf32> to vector<2x96xf32>
    %113 = arith.negf %112 : vector<2x96xf32>
    %114 = math.exp %113 : vector<2x96xf32>
    %cst_36 = arith.constant 1.000000e+00 : f32
    %115 = vector.broadcast %cst_36 : f32 to vector<2x96xf32>
    %116 = arith.addf %115, %114 : vector<2x96xf32>
    %117 = arith.divf %115, %116 : vector<2x96xf32>
    %118 = vector.extract_strided_slice %117 {offsets = [0, 0], sizes = [2, 32], strides = [1, 1]} : vector<2x96xf32> to vector<2x32xf32>
    %119 = vector.extract_strided_slice %117 {offsets = [0, 32], sizes = [2, 32], strides = [1, 1]} : vector<2x96xf32> to vector<2x32xf32>
    %120 = vector.extract_strided_slice %117 {offsets = [0, 64], sizes = [2, 32], strides = [1, 1]} : vector<2x96xf32> to vector<2x32xf32>
    %121 = vector.extract_strided_slice %111 {offsets = [0, 96], sizes = [2, 32], strides = [1, 1]} : vector<2x128xf32> to vector<2x32xf32>
    %122 = math.tanh %121 : vector<2x32xf32>
    %123 = arith.mulf %119, %94 : vector<2x32xf32>
    %124 = arith.mulf %118, %122 : vector<2x32xf32>
    %125 = arith.addf %123, %124 : vector<2x32xf32>
    %126 = math.tanh %125 : vector<2x32xf32>
    %127 = arith.mulf %120, %126 : vector<2x32xf32>
    %128 = vector.broadcast %8 : vector<1x32xf32> to vector<2x32xf32>
    %129 = arith.mulf %127, %128 : vector<2x32xf32>
    %cst_37 = arith.constant dense<0.000000e+00> : vector<2xf32>
    %130 = vector.multi_reduction <add>, %129, %cst_37 [1] : vector<2x32xf32> to vector<2xf32>
    %131 = vector.broadcast %10 : f32 to vector<2xf32>
    %132 = arith.addf %130, %131 : vector<2xf32>
    %133 = arith.index_cast %c3_i32 : i32 to index
    %c0_38 = arith.constant 0 : index
    %134 = vector.load %arg6[%133, %c0_38] : memref<8x2xf32, #tpu.memory_space<vmem>>, vector<1x2xf32>
    %135 = vector.shape_cast %134 : vector<1x2xf32> to vector<2xf32>
    %136 = vector.shape_cast %132 : vector<2xf32> to vector<1x2xf32>
    tpu.vector_store %arg6[%133, %c0_38], %136 {strides = array<i32>} : memref<8x2xf32, #tpu.memory_space<vmem>>, vector<1x2xf32>,
    %c4_i32 = arith.constant 4 : i32
    %c2_i32_39 = arith.constant 2 : i32
    %137 = arith.muli %c4_i32, %c2_i32_39 : i32
    %138 = tpu.assume_multiple %137, 2 : i32
    %139 = arith.index_cast %138 : i32 to index
    %c0_40 = arith.constant 0 : index
    %140 = vector.load %arg7[%139, %c0_40] : memref<16x128xf32, #tpu.memory_space<vmem>>, vector<2x128xf32>
    %cst_41 = arith.constant dense<0.000000e+00> : vector<2x128xf32>
    %141 = tpu.matmul %127, %7, %cst_41 {dimension_numbers = #tpu.dot_dimension_numbers<[1], [0], [0], [1], [0, 0, 1, 1], [], []>} : vector<2x32xf32>, vector<32x128xf32>, vector<2x128xf32> -> vector<2x128xf32>
    %142 = arith.addf %140, %141 : vector<2x128xf32>
    %143 = vector.extract_strided_slice %142 {offsets = [0, 0], sizes = [2, 96], strides = [1, 1]} : vector<2x128xf32> to vector<2x96xf32>
    %144 = arith.negf %143 : vector<2x96xf32>
    %145 = math.exp %144 : vector<2x96xf32>
    %cst_42 = arith.constant 1.000000e+00 : f32
    %146 = vector.broadcast %cst_42 : f32 to vector<2x96xf32>
    %147 = arith.addf %146, %145 : vector<2x96xf32>
    %148 = arith.divf %146, %147 : vector<2x96xf32>
    %149 = vector.extract_strided_slice %148 {offsets = [0, 0], sizes = [2, 32], strides = [1, 1]} : vector<2x96xf32> to vector<2x32xf32>
    %150 = vector.extract_strided_slice %148 {offsets = [0, 32], sizes = [2, 32], strides = [1, 1]} : vector<2x96xf32> to vector<2x32xf32>
    %151 = vector.extract_strided_slice %148 {offsets = [0, 64], sizes = [2, 32], strides = [1, 1]} : vector<2x96xf32> to vector<2x32xf32>
    %152 = vector.extract_strided_slice %142 {offsets = [0, 96], sizes = [2, 32], strides = [1, 1]} : vector<2x128xf32> to vector<2x32xf32>
    %153 = math.tanh %152 : vector<2x32xf32>
    %154 = arith.mulf %150, %125 : vector<2x32xf32>
    %155 = arith.mulf %149, %153 : vector<2x32xf32>
    %156 = arith.addf %154, %155 : vector<2x32xf32>
    %157 = math.tanh %156 : vector<2x32xf32>
    %158 = arith.mulf %151, %157 : vector<2x32xf32>
    %159 = vector.broadcast %8 : vector<1x32xf32> to vector<2x32xf32>
    %160 = arith.mulf %158, %159 : vector<2x32xf32>
    %cst_43 = arith.constant dense<0.000000e+00> : vector<2xf32>
    %161 = vector.multi_reduction <add>, %160, %cst_43 [1] : vector<2x32xf32> to vector<2xf32>
    %162 = vector.broadcast %10 : f32 to vector<2xf32>
    %163 = arith.addf %161, %162 : vector<2xf32>
    %164 = arith.index_cast %c4_i32 : i32 to index
    %c0_44 = arith.constant 0 : index
    %165 = vector.load %arg6[%164, %c0_44] : memref<8x2xf32, #tpu.memory_space<vmem>>, vector<1x2xf32>
    %166 = vector.shape_cast %165 : vector<1x2xf32> to vector<2xf32>
    %167 = vector.shape_cast %163 : vector<2xf32> to vector<1x2xf32>
    tpu.vector_store %arg6[%164, %c0_44], %167 {strides = array<i32>} : memref<8x2xf32, #tpu.memory_space<vmem>>, vector<1x2xf32>,
    %c5_i32 = arith.constant 5 : i32
    %c2_i32_45 = arith.constant 2 : i32
    %168 = arith.muli %c5_i32, %c2_i32_45 : i32
    %169 = tpu.assume_multiple %168, 2 : i32
    %170 = arith.index_cast %169 : i32 to index
    %c0_46 = arith.constant 0 : index
    %171 = vector.load %arg7[%170, %c0_46] : memref<16x128xf32, #tpu.memory_space<vmem>>, vector<2x128xf32>
    %cst_47 = arith.constant dense<0.000000e+00> : vector<2x128xf32>
    %172 = tpu.matmul %158, %7, %cst_47 {dimension_numbers = #tpu.dot_dimension_numbers<[1], [0], [0], [1], [0, 0, 1, 1], [], []>} : vector<2x32xf32>, vector<32x128xf32>, vector<2x128xf32> -> vector<2x128xf32>
    %173 = arith.addf %171, %172 : vector<2x128xf32>
    %174 = vector.extract_strided_slice %173 {offsets = [0, 0], sizes = [2, 96], strides = [1, 1]} : vector<2x128xf32> to vector<2x96xf32>
    %175 = arith.negf %174 : vector<2x96xf32>
    %176 = math.exp %175 : vector<2x96xf32>
    %cst_48 = arith.constant 1.000000e+00 : f32
    %177 = vector.broadcast %cst_48 : f32 to vector<2x96xf32>
    %178 = arith.addf %177, %176 : vector<2x96xf32>
    %179 = arith.divf %177, %178 : vector<2x96xf32>
    %180 = vector.extract_strided_slice %179 {offsets = [0, 0], sizes = [2, 32], strides = [1, 1]} : vector<2x96xf32> to vector<2x32xf32>
    %181 = vector.extract_strided_slice %179 {offsets = [0, 32], sizes = [2, 32], strides = [1, 1]} : vector<2x96xf32> to vector<2x32xf32>
    %182 = vector.extract_strided_slice %179 {offsets = [0, 64], sizes = [2, 32], strides = [1, 1]} : vector<2x96xf32> to vector<2x32xf32>
    %183 = vector.extract_strided_slice %173 {offsets = [0, 96], sizes = [2, 32], strides = [1, 1]} : vector<2x128xf32> to vector<2x32xf32>
    %184 = math.tanh %183 : vector<2x32xf32>
    %185 = arith.mulf %181, %156 : vector<2x32xf32>
    %186 = arith.mulf %180, %184 : vector<2x32xf32>
    %187 = arith.addf %185, %186 : vector<2x32xf32>
    %188 = math.tanh %187 : vector<2x32xf32>
    %189 = arith.mulf %182, %188 : vector<2x32xf32>
    %190 = vector.broadcast %8 : vector<1x32xf32> to vector<2x32xf32>
    %191 = arith.mulf %189, %190 : vector<2x32xf32>
    %cst_49 = arith.constant dense<0.000000e+00> : vector<2xf32>
    %192 = vector.multi_reduction <add>, %191, %cst_49 [1] : vector<2x32xf32> to vector<2xf32>
    %193 = vector.broadcast %10 : f32 to vector<2xf32>
    %194 = arith.addf %192, %193 : vector<2xf32>
    %195 = arith.index_cast %c5_i32 : i32 to index
    %c0_50 = arith.constant 0 : index
    %196 = vector.load %arg6[%195, %c0_50] : memref<8x2xf32, #tpu.memory_space<vmem>>, vector<1x2xf32>
    %197 = vector.shape_cast %196 : vector<1x2xf32> to vector<2xf32>
    %198 = vector.shape_cast %194 : vector<2xf32> to vector<1x2xf32>
    tpu.vector_store %arg6[%195, %c0_50], %198 {strides = array<i32>} : memref<8x2xf32, #tpu.memory_space<vmem>>, vector<1x2xf32>,
    %c6_i32 = arith.constant 6 : i32
    %c2_i32_51 = arith.constant 2 : i32
    %199 = arith.muli %c6_i32, %c2_i32_51 : i32
    %200 = tpu.assume_multiple %199, 2 : i32
    %201 = arith.index_cast %200 : i32 to index
    %c0_52 = arith.constant 0 : index
    %202 = vector.load %arg7[%201, %c0_52] : memref<16x128xf32, #tpu.memory_space<vmem>>, vector<2x128xf32>
    %cst_53 = arith.constant dense<0.000000e+00> : vector<2x128xf32>
    %203 = tpu.matmul %189, %7, %cst_53 {dimension_numbers = #tpu.dot_dimension_numbers<[1], [0], [0], [1], [0, 0, 1, 1], [], []>} : vector<2x32xf32>, vector<32x128xf32>, vector<2x128xf32> -> vector<2x128xf32>
    %204 = arith.addf %202, %203 : vector<2x128xf32>
    %205 = vector.extract_strided_slice %204 {offsets = [0, 0], sizes = [2, 96], strides = [1, 1]} : vector<2x128xf32> to vector<2x96xf32>
    %206 = arith.negf %205 : vector<2x96xf32>
    %207 = math.exp %206 : vector<2x96xf32>
    %cst_54 = arith.constant 1.000000e+00 : f32
    %208 = vector.broadcast %cst_54 : f32 to vector<2x96xf32>
    %209 = arith.addf %208, %207 : vector<2x96xf32>
    %210 = arith.divf %208, %209 : vector<2x96xf32>
    %211 = vector.extract_strided_slice %210 {offsets = [0, 0], sizes = [2, 32], strides = [1, 1]} : vector<2x96xf32> to vector<2x32xf32>
    %212 = vector.extract_strided_slice %210 {offsets = [0, 32], sizes = [2, 32], strides = [1, 1]} : vector<2x96xf32> to vector<2x32xf32>
    %213 = vector.extract_strided_slice %210 {offsets = [0, 64], sizes = [2, 32], strides = [1, 1]} : vector<2x96xf32> to vector<2x32xf32>
    %214 = vector.extract_strided_slice %204 {offsets = [0, 96], sizes = [2, 32], strides = [1, 1]} : vector<2x128xf32> to vector<2x32xf32>
    %215 = math.tanh %214 : vector<2x32xf32>
    %216 = arith.mulf %212, %187 : vector<2x32xf32>
    %217 = arith.mulf %211, %215 : vector<2x32xf32>
    %218 = arith.addf %216, %217 : vector<2x32xf32>
    %219 = math.tanh %218 : vector<2x32xf32>
    %220 = arith.mulf %213, %219 : vector<2x32xf32>
    %221 = vector.broadcast %8 : vector<1x32xf32> to vector<2x32xf32>
    %222 = arith.mulf %220, %221 : vector<2x32xf32>
    %cst_55 = arith.constant dense<0.000000e+00> : vector<2xf32>
    %223 = vector.multi_reduction <add>, %222, %cst_55 [1] : vector<2x32xf32> to vector<2xf32>
    %224 = vector.broadcast %10 : f32 to vector<2xf32>
    %225 = arith.addf %223, %224 : vector<2xf32>
    %226 = arith.index_cast %c6_i32 : i32 to index
    %c0_56 = arith.constant 0 : index
    %227 = vector.load %arg6[%226, %c0_56] : memref<8x2xf32, #tpu.memory_space<vmem>>, vector<1x2xf32>
    %228 = vector.shape_cast %227 : vector<1x2xf32> to vector<2xf32>
    %229 = vector.shape_cast %225 : vector<2xf32> to vector<1x2xf32>
    tpu.vector_store %arg6[%226, %c0_56], %229 {strides = array<i32>} : memref<8x2xf32, #tpu.memory_space<vmem>>, vector<1x2xf32>,
    %c7_i32 = arith.constant 7 : i32
    %c2_i32_57 = arith.constant 2 : i32
    %230 = arith.muli %c7_i32, %c2_i32_57 : i32
    %231 = tpu.assume_multiple %230, 2 : i32
    %232 = arith.index_cast %231 : i32 to index
    %c0_58 = arith.constant 0 : index
    %233 = vector.load %arg7[%232, %c0_58] : memref<16x128xf32, #tpu.memory_space<vmem>>, vector<2x128xf32>
    %cst_59 = arith.constant dense<0.000000e+00> : vector<2x128xf32>
    %234 = tpu.matmul %220, %7, %cst_59 {dimension_numbers = #tpu.dot_dimension_numbers<[1], [0], [0], [1], [0, 0, 1, 1], [], []>} : vector<2x32xf32>, vector<32x128xf32>, vector<2x128xf32> -> vector<2x128xf32>
    %235 = arith.addf %233, %234 : vector<2x128xf32>
    %236 = vector.extract_strided_slice %235 {offsets = [0, 0], sizes = [2, 96], strides = [1, 1]} : vector<2x128xf32> to vector<2x96xf32>
    %237 = arith.negf %236 : vector<2x96xf32>
    %238 = math.exp %237 : vector<2x96xf32>
    %cst_60 = arith.constant 1.000000e+00 : f32
    %239 = vector.broadcast %cst_60 : f32 to vector<2x96xf32>
    %240 = arith.addf %239, %238 : vector<2x96xf32>
    %241 = arith.divf %239, %240 : vector<2x96xf32>
    %242 = vector.extract_strided_slice %241 {offsets = [0, 0], sizes = [2, 32], strides = [1, 1]} : vector<2x96xf32> to vector<2x32xf32>
    %243 = vector.extract_strided_slice %241 {offsets = [0, 32], sizes = [2, 32], strides = [1, 1]} : vector<2x96xf32> to vector<2x32xf32>
    %244 = vector.extract_strided_slice %241 {offsets = [0, 64], sizes = [2, 32], strides = [1, 1]} : vector<2x96xf32> to vector<2x32xf32>
    %245 = vector.extract_strided_slice %235 {offsets = [0, 96], sizes = [2, 32], strides = [1, 1]} : vector<2x128xf32> to vector<2x32xf32>
    %246 = math.tanh %245 : vector<2x32xf32>
    %247 = arith.mulf %243, %218 : vector<2x32xf32>
    %248 = arith.mulf %242, %246 : vector<2x32xf32>
    %249 = arith.addf %247, %248 : vector<2x32xf32>
    %250 = math.tanh %249 : vector<2x32xf32>
    %251 = arith.mulf %244, %250 : vector<2x32xf32>
    %252 = vector.broadcast %8 : vector<1x32xf32> to vector<2x32xf32>
    %253 = arith.mulf %251, %252 : vector<2x32xf32>
    %cst_61 = arith.constant dense<0.000000e+00> : vector<2xf32>
    %254 = vector.multi_reduction <add>, %253, %cst_61 [1] : vector<2x32xf32> to vector<2xf32>
    %255 = vector.broadcast %10 : f32 to vector<2xf32>
    %256 = arith.addf %254, %255 : vector<2xf32>
    %257 = arith.index_cast %c7_i32 : i32 to index
    %c0_62 = arith.constant 0 : index
    %258 = vector.load %arg6[%257, %c0_62] : memref<8x2xf32, #tpu.memory_space<vmem>>, vector<1x2xf32>
    %259 = vector.shape_cast %258 : vector<1x2xf32> to vector<2xf32>
    %260 = vector.shape_cast %256 : vector<2xf32> to vector<1x2xf32>
    tpu.vector_store %arg6[%257, %c0_62], %260 {strides = array<i32>} : memref<8x2xf32, #tpu.memory_space<vmem>>, vector<1x2xf32>,
    %c8_i32 = arith.constant 8 : i32
    return
  }
}

</mosaic_0001>

<llo_original>
// kernel: lstm_net_forward.1
$region0: #{lstm_net_forward.1}
  #allocation0 [shape = 'u32[]', space=smem, size = 0x4, offset = 0x4, fixed_abs, tag = 'smem constant byte address 0x4 - core index']
  #allocation1 [shape = 'u32[72,128]{1,0:T(1,128)}', space=vmem, size = 0x9000, scoped, tag = 'internal scratch']
  #allocation2 [shape = 'f32[16,128]{1,0:T(8,128)}', space=vmem, size = 0x2000, scoped, tag = 'scratch operand']
  #allocation3 [shape = 'f32[1,1]{1,0:T(1,128)S(1)}', space=vmem, size = 0x200, scoped, tag = 'scoped memory for lstm_net_forward.1']
  %s0 = inlined_call_operand.vmem [shape: f32[16,16], index: 0, kind: input, shape index: {}]
  %s1 = inlined_call_operand.vmem [shape: f32[16,128], index: 1, kind: input, shape index: {}]
  %s2 = inlined_call_operand.vmem [shape: f32[32,128], index: 2, kind: input, shape index: {}]
  %s3 = inlined_call_operand.vmem [shape: f32[1,128], index: 3, kind: input, shape index: {}]
  %s4 = inlined_call_operand.vmem [shape: f32[1,32], index: 4, kind: input, shape index: {}]
  %s5 = inlined_call_operand.<no memory space> [shape: f32[1,1], index: 5, kind: input, shape index: {}]
  %s6 = inlined_call_operand.vmem [shape: f32[8,2], index: 6, kind: output, shape index: {}]
  %s7 = sld [smem:[#allocation0]]
  $region34: #{lstm_net_forward.1} parent=0
    _
  %s9 = ssub.s32 1, %s7
  %s10 = scalar_select 0, %s9, %s7
  %v11 = vstv %s5
  %12 = vst [vmem:[#allocation3] sm:$0x1] %v11
  // Predicated region
  $region2: #{lstm_net_forward.1} parent=0 // pred_check
    _
  $region3: #{lstm_net_forward.1} parent=0 // pred_check_branch
    %14 = sbr.rel (0) target = $region5
  $region4: #{lstm_net_forward.1} parent=0 // pred_region
    _
  $region5: #{lstm_net_forward.1} parent=0 // pred_fallthru
    _
  // Predicated region
  $region6: #{lstm_net_forward.1} parent=0 // pred_check
    _
  $region7: #{lstm_net_forward.1} parent=0 // pred_check_branch
    %16 = sbr.rel (0) target = $region9
  $region8: #{lstm_net_forward.1} parent=0 // pred_region
    _
  $region9: #{lstm_net_forward.1} parent=0 // pred_fallthru
    _
  // Predicated region
  $region10: #{lstm_net_forward.1} parent=0 // pred_check
    _
  $region11: #{lstm_net_forward.1} parent=0 // pred_check_branch
    %18 = sbr.rel (0) target = $region13
  $region12: #{lstm_net_forward.1} parent=0 // pred_region
    _
  $region13: #{lstm_net_forward.1} parent=0 // pred_fallthru
    _
  // Predicated region
  $region14: #{lstm_net_forward.1} parent=0 // pred_check
    _
  $region15: #{lstm_net_forward.1} parent=0 // pred_check_branch
    %20 = sbr.rel (0) target = $region17
  $region16: #{lstm_net_forward.1} parent=0 // pred_region
    _
  $region17: #{lstm_net_forward.1} parent=0 // pred_fallthru
    _
  // Predicated region
  $region18: #{lstm_net_forward.1} parent=0 // pred_check
    _
  $region19: #{lstm_net_forward.1} parent=0 // pred_check_branch
    %22 = sbr.rel (0) target = $region21
  $region20: #{lstm_net_forward.1} parent=0 // pred_region
    _
  $region21: #{lstm_net_forward.1} parent=0 // pred_fallthru
    _
  // Predicated region
  $region22: #{lstm_net_forward.1} parent=0 // pred_check
    _
  $region23: #{lstm_net_forward.1} parent=0 // pred_check_branch
    %24 = sbr.rel (0) target = $region25
  $region24: #{lstm_net_forward.1} parent=0 // pred_region
    _
  $region25: #{lstm_net_forward.1} parent=0 // pred_fallthru
    _
  %v25 = vld [vmem:[%s0] sm:$0xff]
  %v26 = vld [vmem:[%s0 + $0x8] sm:$0xff]
  %v27 = vld [vmem:[%s1] sm:$0xff]
  %v28 = vld [vmem:[%s1 + $0x8] sm:$0xff]
  %v29 = vld [vmem:[%s3] sm:$0x1]
  %v31 = vperm.slane %v29, 0
  %vm33 = vcmask 130048
  %v35 = vsel %vm33, %v25, 0
  %v38 = vsel %vm33, %v26, 0
  %40 = vmatpush.msra.mxu0 0.0
  %41 = vmatpush.msra.mxu0 0.0
  %42 = vmatpush.msra.mxu0 0.0
  %43 = vmatpush.msra.mxu0 0.0
  %44 = vmatpush.msra.mxu0 0.0
  %45 = vmatpush.msra.mxu0 0.0
  %46 = vmatpush.msra.mxu0 0.0
  %47 = vmatpush.msra.mxu0 0.0
  %48 = vmatpush.msra.mxu0 0.0
  %49 = vmatpush.msra.mxu0 0.0
  %50 = vmatpush.msra.mxu0 0.0
  %51 = vmatpush.msra.mxu0 0.0
  %52 = vmatpush.msra.mxu0 0.0
  %53 = vmatpush.msra.mxu0 0.0
  %54 = vmatpush.msra.mxu0 %v28
  %55 = vmatpush.msra.mxu0 %v27
  %56 = vmatmul.f32.gmra.mxu0 %v35
  %v57 = vpop.f32.mrf.mxu0
  %v58 = vadd.f32 %v31, %v57
  %59 = vmatmul.f32.gmra.mxu0 %v38
  %v60 = vpop.f32.mrf.mxu0
  %v61 = vadd.f32 %v31, %v60
  %62 = vdwg.mxu0
  %63 = vst [vmem:[#allocation2] sm:$0xff] %v58
  %64 = vst [vmem:[#allocation2 + $0x8] sm:$0xff] %v61
  %v65 = vld [vmem:[%s2] sm:$0xff]
  %v66 = vld [vmem:[%s2 + $0x8] sm:$0xff]
  %v67 = vld [vmem:[%s2 + $0x10] sm:$0xff]
  %v68 = vld [vmem:[%s2 + $0x18] sm:$0xff]
  %v69 = vld [vmem:[%s4] sm:$0x1]
  %v70 = vld [vmem:[#allocation3] sm:$0x1]
  %s71 = vtos %v70
  %v72 = vld [vmem:[#allocation2] sm:$0x3]
  %vm73 = vcmask 261120
  %v75 = vsel %vm73, 0.0, 0
  %77 = vmatpush.msra.mxu0 0.0
  %78 = vmatpush.msra.mxu0 0.0
  %79 = vmatpush.msra.mxu0 0.0
  %80 = vmatpush.msra.mxu0 0.0
  %81 = vmatpush.msra.mxu0 0.0
  %82 = vmatpush.msra.mxu0 0.0
  %83 = vmatpush.msra.mxu0 0.0
  %84 = vmatpush.msra.mxu0 0.0
  %85 = vmatpush.msra.mxu0 0.0
  %86 = vmatpush.msra.mxu0 0.0
  %87 = vmatpush.msra.mxu0 0.0
  %88 = vmatpush.msra.mxu0 0.0
  %89 = vmatpush.msra.mxu0 %v68
  %90 = vmatpush.msra.mxu0 %v67
  %91 = vmatpush.msra.mxu0 %v66
  %92 = vmatpush.msra.mxu0 %v65
  %93 = vmatmul.f32.gmra.mxu0 %v75
  %v94 = vpop.f32.mrf.mxu0
  %v95 = vadd.f32 0.0, %v94
  %96 = vdwg.mxu0
  %v97 = vadd.f32 %v72, %v95
  %v98 = vxor.u32 %v97, 2147483648
  %v99 = vmul.f32 %v98, 1.442695
  %v100 = vpow.pop %v99
  %v101 = vadd.f32 %v100, 1.0
  %v102 = vrcp.pop %v101
  %v103 = vmul.f32 %v101, %v102
  %v104 = vsub.f32 1.0, %v103
  %v105 = vmul.f32 %v102, %v104
  %v106 = vadd.f32 %v102, %v105
  %vm107 = vweird.f32 %v101
  %vm108 = vweird.f32 %v102
  %vm109 = vmor %vm107, %vm108
  %v110 = vsel %vm109, %v102, %v106
  %v111 = vand.u32 2147483647, %v101
  %vm112 = vcmp.eq.f32.partialorder %v111, 8.507059e+37
  %v113 = vand.u32 %v101, 2147483648
  %v114 = vor.u32 1.1754944e-38, %v113
  %v115 = vsel %vm112, %v114, %v110
  %v116 = vmul.f32 1.0, %v115
  %v117 = vtanh.pop %v97
  %v118 = vmul.f32 %v116, 0.0
  %120 = vrot.lane.b32.xlu0 %v117, 32
  %v121 = vpop.permute.xlu0 %120
  %v123 = vmul.f32 %v116, %v121
  %125 = vrot.lane.b32.xlu0 %v123, 32
  %v126 = vpop.permute.xlu0 %125
  %v128 = vadd.f32 %v118, %v126
  %v129 = vtanh.pop %v128
  %131 = vrot.lane.b32.xlu0 %v129, 32
  %v132 = vpop.permute.xlu0 %131
  %v134 = vmul.f32 %v116, %v132
  %v136 = vperm.slane %v69, 0
  %137 = vrot.lane.b32.xlu0 %v136, 64
  %v138 = vpop.permute.xlu0 %137
  %v140 = vmul.f32 %v134, %v138
  %142 = vrot.lane.b32.xlu0 %v140, 64
  %v143 = vpop.permute.xlu0 %142
  %vm145 = vcmask 254976
  %v146 = vsel %vm145, %v143, 0.0
  %147 = vadd.xlane.f32.xlu0 %v146
  %v148 = vpop.xlane.xlu0 %147
  %v149 = vstv %s71
  %v150 = vadd.f32 %v148, %v149
  %v152 = vlaneseq
  %v153 = vand.u32 %v152, 127
  %v154 = vperm.slane %v150, %v153
  %vm156 = vcmask 8192
  %157 = vst.msk [vmem:[%s6] sm:$0x1] %vm156, %v154
  %s158 = scalar_lea.vmem [#allocation2], 2
  %v159 = vld [vmem:[%s158] sm:$0x3]
  %161 = vrot.lane.b32.xlu0 %v134, 64
  %v162 = vpop.permute.xlu0 %161
  %v163 = vsel %vm73, %v162, 0
  %165 = vmatpush.msra.mxu0 0.0
  %166 = vmatpush.msra.mxu0 0.0
  %167 = vmatpush.msra.mxu0 0.0
  %168 = vmatpush.msra.mxu0 0.0
  %169 = vmatpush.msra.mxu0 0.0
  %170 = vmatpush.msra.mxu0 0.0
  %171 = vmatpush.msra.mxu0 0.0
  %172 = vmatpush.msra.mxu0 0.0
  %173 = vmatpush.msra.mxu0 0.0
  %174 = vmatpush.msra.mxu0 0.0
  %175 = vmatpush.msra.mxu0 0.0
  %176 = vmatpush.msra.mxu0 0.0
  %177 = vmatpush.msra.mxu0 %v68
  %178 = vmatpush.msra.mxu0 %v67
  %179 = vmatpush.msra.mxu0 %v66
  %180 = vmatpush.msra.mxu0 %v65
  %181 = vmatmul.f32.gmra.mxu0 %v163
  %v182 = vpop.f32.mrf.mxu0
  %v183 = vadd.f32 0.0, %v182
  %184 = vdwg.mxu0
  %v185 = vadd.f32 %v159, %v183
  %v186 = vxor.u32 %v185, 2147483648
  %v187 = vmul.f32 %v186, 1.442695
  %v188 = vpow.pop %v187
  %v189 = vadd.f32 %v188, 1.0
  %v190 = vrcp.pop %v189
  %v191 = vmul.f32 %v189, %v190
  %v192 = vsub.f32 1.0, %v191
  %v193 = vmul.f32 %v190, %v192
  %v194 = vadd.f32 %v190, %v193
  %vm195 = vweird.f32 %v189
  %vm196 = vweird.f32 %v190
  %vm197 = vmor %vm195, %vm196
  %v198 = vsel %vm197, %v190, %v194
  %v199 = vand.u32 2147483647, %v189
  %vm200 = vcmp.eq.f32.partialorder %v199, 8.507059e+37
  %v201 = vand.u32 %v189, 2147483648
  %v202 = vor.u32 1.1754944e-38, %v201
  %v203 = vsel %vm200, %v202, %v198
  %v204 = vmul.f32 1.0, %v203
  %v205 = vtanh.pop %v185
  %v206 = vmul.f32 %v204, %v128
  %208 = vrot.lane.b32.xlu0 %v205, 32
  %v209 = vpop.permute.xlu0 %208
  %v211 = vmul.f32 %v204, %v209
  %213 = vrot.lane.b32.xlu0 %v211, 32
  %v214 = vpop.permute.xlu0 %213
  %v216 = vadd.f32 %v206, %v214
  %v217 = vtanh.pop %v216
  %219 = vrot.lane.b32.xlu0 %v217, 32
  %v220 = vpop.permute.xlu0 %219
  %v222 = vmul.f32 %v204, %v220
  %v223 = vmul.f32 %v222, %v138
  %225 = vrot.lane.b32.xlu0 %v223, 64
  %v226 = vpop.permute.xlu0 %225
  %v228 = vsel %vm145, %v226, 0.0
  %229 = vadd.xlane.f32.xlu0 %v228
  %v230 = vpop.xlane.xlu0 %229
  %v231 = vadd.f32 %v230, %v149
  %v233 = vperm.slane %v231, %v153
  %235 = vst.msk [vmem:[%s6 + $0x1] sm:$0x1] %vm156, %v233
  %s236 = scalar_lea.vmem [#allocation2], 4
  %v237 = vld [vmem:[%s236] sm:$0x3]
  %239 = vrot.lane.b32.xlu0 %v222, 64
  %v240 = vpop.permute.xlu0 %239
  %v241 = vsel %vm73, %v240, 0
  %243 = vmatpush.msra.mxu0 0.0
  %244 = vmatpush.msra.mxu0 0.0
  %245 = vmatpush.msra.mxu0 0.0
  %246 = vmatpush.msra.mxu0 0.0
  %247 = vmatpush.msra.mxu0 0.0
  %248 = vmatpush.msra.mxu0 0.0
  %249 = vmatpush.msra.mxu0 0.0
  %250 = vmatpush.msra.mxu0 0.0
  %251 = vmatpush.msra.mxu0 0.0
  %252 = vmatpush.msra.mxu0 0.0
  %253 = vmatpush.msra.mxu0 0.0
  %254 = vmatpush.msra.mxu0 0.0
  %255 = vmatpush.msra.mxu0 %v68
  %256 = vmatpush.msra.mxu0 %v67
  %257 = vmatpush.msra.mxu0 %v66
  %258 = vmatpush.msra.mxu0 %v65
  %259 = vmatmul.f32.gmra.mxu0 %v241
  %v260 = vpop.f32.mrf.mxu0
  %v261 = vadd.f32 0.0, %v260
  %262 = vdwg.mxu0
  %v263 = vadd.f32 %v237, %v261
  %v264 = vxor.u32 %v263, 2147483648
  %v265 = vmul.f32 %v264, 1.442695
  %v266 = vpow.pop %v265
  %v267 = vadd.f32 %v266, 1.0
  %v268 = vrcp.pop %v267
  %v269 = vmul.f32 %v267, %v268
  %v270 = vsub.f32 1.0, %v269
  %v271 = vmul.f32 %v268, %v270
  %v272 = vadd.f32 %v268, %v271
  %vm273 = vweird.f32 %v267
  %vm274 = vweird.f32 %v268
  %vm275 = vmor %vm273, %vm274
  %v276 = vsel %vm275, %v268, %v272
  %v277 = vand.u32 2147483647, %v267
  %vm278 = vcmp.eq.f32.partialorder %v277, 8.507059e+37
  %v279 = vand.u32 %v267, 2147483648
  %v280 = vor.u32 1.1754944e-38, %v279
  %v281 = vsel %vm278, %v280, %v276
  %v282 = vmul.f32 1.0, %v281
  %v283 = vtanh.pop %v263
  %v284 = vmul.f32 %v282, %v216
  %286 = vrot.lane.b32.xlu0 %v283, 32
  %v287 = vpop.permute.xlu0 %286
  %v289 = vmul.f32 %v282, %v287
  %291 = vrot.lane.b32.xlu0 %v289, 32
  %v292 = vpop.permute.xlu0 %291
  %v294 = vadd.f32 %v284, %v292
  %v295 = vtanh.pop %v294
  %297 = vrot.lane.b32.xlu0 %v295, 32
  %v298 = vpop.permute.xlu0 %297
  %v300 = vmul.f32 %v282, %v298
  %v301 = vmul.f32 %v300, %v138
  %303 = vrot.lane.b32.xlu0 %v301, 64
  %v304 = vpop.permute.xlu0 %303
  %v306 = vsel %vm145, %v304, 0.0
  %307 = vadd.xlane.f32.xlu0 %v306
  %v308 = vpop.xlane.xlu0 %307
  %v309 = vadd.f32 %v308, %v149
  %v311 = vperm.slane %v309, %v153
  %313 = vst.msk [vmem:[%s6 + $0x2] sm:$0x1] %vm156, %v311
  %s314 = scalar_lea.vmem [#allocation2], 6
  %v315 = vld [vmem:[%s314] sm:$0x3]
  %317 = vrot.lane.b32.xlu0 %v300, 64
  %v318 = vpop.permute.xlu0 %317
  %v319 = vsel %vm73, %v318, 0
  %321 = vmatpush.msra.mxu0 0.0
  %322 = vmatpush.msra.mxu0 0.0
  %323 = vmatpush.msra.mxu0 0.0
  %324 = vmatpush.msra.mxu0 0.0
  %325 = vmatpush.msra.mxu0 0.0
  %326 = vmatpush.msra.mxu0 0.0
  %327 = vmatpush.msra.mxu0 0.0
  %328 = vmatpush.msra.mxu0 0.0
  %329 = vmatpush.msra.mxu0 0.0
  %330 = vmatpush.msra.mxu0 0.0
  %331 = vmatpush.msra.mxu0 0.0
  %332 = vmatpush.msra.mxu0 0.0
  %333 = vmatpush.msra.mxu0 %v68
  %334 = vmatpush.msra.mxu0 %v67
  %335 = vmatpush.msra.mxu0 %v66
  %336 = vmatpush.msra.mxu0 %v65
  %337 = vmatmul.f32.gmra.mxu0 %v319
  %v338 = vpop.f32.mrf.mxu0
  %v339 = vadd.f32 0.0, %v338
  %340 = vdwg.mxu0
  %v341 = vadd.f32 %v315, %v339
  %v342 = vxor.u32 %v341, 2147483648
  %v343 = vmul.f32 %v342, 1.442695
  %v344 = vpow.pop %v343
  %v345 = vadd.f32 %v344, 1.0
  %v346 = vrcp.pop %v345
  %v347 = vmul.f32 %v345, %v346
  %v348 = vsub.f32 1.0, %v347
  %v349 = vmul.f32 %v346, %v348
  %v350 = vadd.f32 %v346, %v349
  %vm351 = vweird.f32 %v345
  %vm352 = vweird.f32 %v346
  %vm353 = vmor %vm351, %vm352
  %v354 = vsel %vm353, %v346, %v350
  %v355 = vand.u32 2147483647, %v345
  %vm356 = vcmp.eq.f32.partialorder %v355, 8.507059e+37
  %v357 = vand.u32 %v345, 2147483648
  %v358 = vor.u32 1.1754944e-38, %v357
  %v359 = vsel %vm356, %v358, %v354
  %v360 = vmul.f32 1.0, %v359
  %v361 = vtanh.pop %v341
  %v362 = vmul.f32 %v360, %v294
  %364 = vrot.lane.b32.xlu0 %v361, 32
  %v365 = vpop.permute.xlu0 %364
  %v367 = vmul.f32 %v360, %v365
  %369 = vrot.lane.b32.xlu0 %v367, 32
  %v370 = vpop.permute.xlu0 %369
  %v372 = vadd.f32 %v362, %v370
  %v373 = vtanh.pop %v372
  %375 = vrot.lane.b32.xlu0 %v373, 32
  %v376 = vpop.permute.xlu0 %375
  %v378 = vmul.f32 %v360, %v376
  %v379 = vmul.f32 %v378, %v138
  %381 = vrot.lane.b32.xlu0 %v379, 64
  %v382 = vpop.permute.xlu0 %381
  %v384 = vsel %vm145, %v382, 0.0
  %385 = vadd.xlane.f32.xlu0 %v384
  %v386 = vpop.xlane.xlu0 %385
  %v387 = vadd.f32 %v386, %v149
  %v389 = vperm.slane %v387, %v153
  %391 = vst.msk [vmem:[%s6 + $0x3] sm:$0x1] %vm156, %v389
  %s392 = scalar_lea.vmem [#allocation2], 8
  %v393 = vld [vmem:[%s392] sm:$0x3]
  %395 = vrot.lane.b32.xlu0 %v378, 64
  %v396 = vpop.permute.xlu0 %395
  %v397 = vsel %vm73, %v396, 0
  %399 = vmatpush.msra.mxu0 0.0
  %400 = vmatpush.msra.mxu0 0.0
  %401 = vmatpush.msra.mxu0 0.0
  %402 = vmatpush.msra.mxu0 0.0
  %403 = vmatpush.msra.mxu0 0.0
  %404 = vmatpush.msra.mxu0 0.0
  %405 = vmatpush.msra.mxu0 0.0
  %406 = vmatpush.msra.mxu0 0.0
  %407 = vmatpush.msra.mxu0 0.0
  %408 = vmatpush.msra.mxu0 0.0
  %409 = vmatpush.msra.mxu0 0.0
  %410 = vmatpush.msra.mxu0 0.0
  %411 = vmatpush.msra.mxu0 %v68
  %412 = vmatpush.msra.mxu0 %v67
  %413 = vmatpush.msra.mxu0 %v66
  %414 = vmatpush.msra.mxu0 %v65
  %415 = vmatmul.f32.gmra.mxu0 %v397
  %v416 = vpop.f32.mrf.mxu0
  %v417 = vadd.f32 0.0, %v416
  %418 = vdwg.mxu0
  %v419 = vadd.f32 %v393, %v417
  %v420 = vxor.u32 %v419, 2147483648
  %v421 = vmul.f32 %v420, 1.442695
  %v422 = vpow.pop %v421
  %v423 = vadd.f32 %v422, 1.0
  %v424 = vrcp.pop %v423
  %v425 = vmul.f32 %v423, %v424
  %v426 = vsub.f32 1.0, %v425
  %v427 = vmul.f32 %v424, %v426
  %v428 = vadd.f32 %v424, %v427
  %vm429 = vweird.f32 %v423
  %vm430 = vweird.f32 %v424
  %vm431 = vmor %vm429, %vm430
  %v432 = vsel %vm431, %v424, %v428
  %v433 = vand.u32 2147483647, %v423
  %vm434 = vcmp.eq.f32.partialorder %v433, 8.507059e+37
  %v435 = vand.u32 %v423, 2147483648
  %v436 = vor.u32 1.1754944e-38, %v435
  %v437 = vsel %vm434, %v436, %v432
  %v438 = vmul.f32 1.0, %v437
  %v439 = vtanh.pop %v419
  %v440 = vmul.f32 %v438, %v372
  %442 = vrot.lane.b32.xlu0 %v439, 32
  %v443 = vpop.permute.xlu0 %442
  %v445 = vmul.f32 %v438, %v443
  %447 = vrot.lane.b32.xlu0 %v445, 32
  %v448 = vpop.permute.xlu0 %447
  %v450 = vadd.f32 %v440, %v448
  %v451 = vtanh.pop %v450
  %453 = vrot.lane.b32.xlu0 %v451, 32
  %v454 = vpop.permute.xlu0 %453
  %v456 = vmul.f32 %v438, %v454
  %v457 = vmul.f32 %v456, %v138
  %459 = vrot.lane.b32.xlu0 %v457, 64
  %v460 = vpop.permute.xlu0 %459
  %v462 = vsel %vm145, %v460, 0.0
  %463 = vadd.xlane.f32.xlu0 %v462
  %v464 = vpop.xlane.xlu0 %463
  %v465 = vadd.f32 %v464, %v149
  %v467 = vperm.slane %v465, %v153
  %469 = vst.msk [vmem:[%s6 + $0x4] sm:$0x1] %vm156, %v467
  %s470 = scalar_lea.vmem [#allocation2], 10
  %v471 = vld [vmem:[%s470] sm:$0x3]
  %473 = vrot.lane.b32.xlu0 %v456, 64
  %v474 = vpop.permute.xlu0 %473
  %v475 = vsel %vm73, %v474, 0
  %477 = vmatpush.msra.mxu0 0.0
  %478 = vmatpush.msra.mxu0 0.0
  %479 = vmatpush.msra.mxu0 0.0
  %480 = vmatpush.msra.mxu0 0.0
  %481 = vmatpush.msra.mxu0 0.0
  %482 = vmatpush.msra.mxu0 0.0
  %483 = vmatpush.msra.mxu0 0.0
  %484 = vmatpush.msra.mxu0 0.0
  %485 = vmatpush.msra.mxu0 0.0
  %486 = vmatpush.msra.mxu0 0.0
  %487 = vmatpush.msra.mxu0 0.0
  %488 = vmatpush.msra.mxu0 0.0
  %489 = vmatpush.msra.mxu0 %v68
  %490 = vmatpush.msra.mxu0 %v67
  %491 = vmatpush.msra.mxu0 %v66
  %492 = vmatpush.msra.mxu0 %v65
  %493 = vmatmul.f32.gmra.mxu0 %v475
  %v494 = vpop.f32.mrf.mxu0
  %v495 = vadd.f32 0.0, %v494
  %496 = vdwg.mxu0
  %v497 = vadd.f32 %v471, %v495
  %v498 = vxor.u32 %v497, 2147483648
  %v499 = vmul.f32 %v498, 1.442695
  %v500 = vpow.pop %v499
  %v501 = vadd.f32 %v500, 1.0
  %v502 = vrcp.pop %v501
  %v503 = vmul.f32 %v501, %v502
  %v504 = vsub.f32 1.0, %v503
  %v505 = vmul.f32 %v502, %v504
  %v506 = vadd.f32 %v502, %v505
  %vm507 = vweird.f32 %v501
  %vm508 = vweird.f32 %v502
  %vm509 = vmor %vm507, %vm508
  %v510 = vsel %vm509, %v502, %v506
  %v511 = vand.u32 2147483647, %v501
  %vm512 = vcmp.eq.f32.partialorder %v511, 8.507059e+37
  %v513 = vand.u32 %v501, 2147483648
  %v514 = vor.u32 1.1754944e-38, %v513
  %v515 = vsel %vm512, %v514, %v510
  %v516 = vmul.f32 1.0, %v515
  %v517 = vtanh.pop %v497
  %v518 = vmul.f32 %v516, %v450
  %520 = vrot.lane.b32.xlu0 %v517, 32
  %v521 = vpop.permute.xlu0 %520
  %v523 = vmul.f32 %v516, %v521
  %525 = vrot.lane.b32.xlu0 %v523, 32
  %v526 = vpop.permute.xlu0 %525
  %v528 = vadd.f32 %v518, %v526
  %v529 = vtanh.pop %v528
  %531 = vrot.lane.b32.xlu0 %v529, 32
  %v532 = vpop.permute.xlu0 %531
  %v534 = vmul.f32 %v516, %v532
  %v535 = vmul.f32 %v534, %v138
  %537 = vrot.lane.b32.xlu0 %v535, 64
  %v538 = vpop.permute.xlu0 %537
  %v540 = vsel %vm145, %v538, 0.0
  %541 = vadd.xlane.f32.xlu0 %v540
  %v542 = vpop.xlane.xlu0 %541
  %v543 = vadd.f32 %v542, %v149
  %v545 = vperm.slane %v543, %v153
  %547 = vst.msk [vmem:[%s6 + $0x5] sm:$0x1] %vm156, %v545
  %s548 = scalar_lea.vmem [#allocation2], 12
  %v549 = vld [vmem:[%s548] sm:$0x3]
  %551 = vrot.lane.b32.xlu0 %v534, 64
  %v552 = vpop.permute.xlu0 %551
  %v553 = vsel %vm73, %v552, 0
  %555 = vmatpush.msra.mxu0 0.0
  %556 = vmatpush.msra.mxu0 0.0
  %557 = vmatpush.msra.mxu0 0.0
  %558 = vmatpush.msra.mxu0 0.0
  %559 = vmatpush.msra.mxu0 0.0
  %560 = vmatpush.msra.mxu0 0.0
  %561 = vmatpush.msra.mxu0 0.0
  %562 = vmatpush.msra.mxu0 0.0
  %563 = vmatpush.msra.mxu0 0.0
  %564 = vmatpush.msra.mxu0 0.0
  %565 = vmatpush.msra.mxu0 0.0
  %566 = vmatpush.msra.mxu0 0.0
  %567 = vmatpush.msra.mxu0 %v68
  %568 = vmatpush.msra.mxu0 %v67
  %569 = vmatpush.msra.mxu0 %v66
  %570 = vmatpush.msra.mxu0 %v65
  %571 = vmatmul.f32.gmra.mxu0 %v553
  %v572 = vpop.f32.mrf.mxu0
  %v573 = vadd.f32 0.0, %v572
  %574 = vdwg.mxu0
  %v575 = vadd.f32 %v549, %v573
  %v576 = vxor.u32 %v575, 2147483648
  %v577 = vmul.f32 %v576, 1.442695
  %v578 = vpow.pop %v577
  %v579 = vadd.f32 %v578, 1.0
  %v580 = vrcp.pop %v579
  %v581 = vmul.f32 %v579, %v580
  %v582 = vsub.f32 1.0, %v581
  %v583 = vmul.f32 %v580, %v582
  %v584 = vadd.f32 %v580, %v583
  %vm585 = vweird.f32 %v579
  %vm586 = vweird.f32 %v580
  %vm587 = vmor %vm585, %vm586
  %v588 = vsel %vm587, %v580, %v584
  %v589 = vand.u32 2147483647, %v579
  %vm590 = vcmp.eq.f32.partialorder %v589, 8.507059e+37
  %v591 = vand.u32 %v579, 2147483648
  %v592 = vor.u32 1.1754944e-38, %v591
  %v593 = vsel %vm590, %v592, %v588
  %v594 = vmul.f32 1.0, %v593
  %v595 = vtanh.pop %v575
  %v596 = vmul.f32 %v594, %v528
  %598 = vrot.lane.b32.xlu0 %v595, 32
  %v599 = vpop.permute.xlu0 %598
  %v601 = vmul.f32 %v594, %v599
  %603 = vrot.lane.b32.xlu0 %v601, 32
  %v604 = vpop.permute.xlu0 %603
  %v606 = vadd.f32 %v596, %v604
  %v607 = vtanh.pop %v606
  %609 = vrot.lane.b32.xlu0 %v607, 32
  %v610 = vpop.permute.xlu0 %609
  %v612 = vmul.f32 %v594, %v610
  %v613 = vmul.f32 %v612, %v138
  %615 = vrot.lane.b32.xlu0 %v613, 64
  %v616 = vpop.permute.xlu0 %615
  %v618 = vsel %vm145, %v616, 0.0
  %619 = vadd.xlane.f32.xlu0 %v618
  %v620 = vpop.xlane.xlu0 %619
  %v621 = vadd.f32 %v620, %v149
  %v623 = vperm.slane %v621, %v153
  %625 = vst.msk [vmem:[%s6 + $0x6] sm:$0x1] %vm156, %v623
  %s626 = scalar_lea.vmem [#allocation2], 14
  %v627 = vld [vmem:[%s626] sm:$0x3]
  %629 = vrot.lane.b32.xlu0 %v612, 64
  %v630 = vpop.permute.xlu0 %629
  %v631 = vsel %vm73, %v630, 0
  %633 = vmatpush.msra.mxu0 0.0
  %634 = vmatpush.msra.mxu0 0.0
  %635 = vmatpush.msra.mxu0 0.0
  %636 = vmatpush.msra.mxu0 0.0
  %637 = vmatpush.msra.mxu0 0.0
  %638 = vmatpush.msra.mxu0 0.0
  %639 = vmatpush.msra.mxu0 0.0
  %640 = vmatpush.msra.mxu0 0.0
  %641 = vmatpush.msra.mxu0 0.0
  %642 = vmatpush.msra.mxu0 0.0
  %643 = vmatpush.msra.mxu0 0.0
  %644 = vmatpush.msra.mxu0 0.0
  %645 = vmatpush.msra.mxu0 %v68
  %646 = vmatpush.msra.mxu0 %v67
  %647 = vmatpush.msra.mxu0 %v66
  %648 = vmatpush.msra.mxu0 %v65
  %649 = vmatmul.f32.gmra.mxu0 %v631
  %v650 = vpop.f32.mrf.mxu0
  %v651 = vadd.f32 0.0, %v650
  %652 = vdwg.mxu0
  %v653 = vadd.f32 %v627, %v651
  %v654 = vxor.u32 %v653, 2147483648
  %v655 = vmul.f32 %v654, 1.442695
  %v656 = vpow.pop %v655
  %v657 = vadd.f32 %v656, 1.0
  %v658 = vrcp.pop %v657
  %v659 = vmul.f32 %v657, %v658
  %v660 = vsub.f32 1.0, %v659
  %v661 = vmul.f32 %v658, %v660
  %v662 = vadd.f32 %v658, %v661
  %vm663 = vweird.f32 %v657
  %vm664 = vweird.f32 %v658
  %vm665 = vmor %vm663, %vm664
  %v666 = vsel %vm665, %v658, %v662
  %v667 = vand.u32 2147483647, %v657
  %vm668 = vcmp.eq.f32.partialorder %v667, 8.507059e+37
  %v669 = vand.u32 %v657, 2147483648
  %v670 = vor.u32 1.1754944e-38, %v669
  %v671 = vsel %vm668, %v670, %v666
  %v672 = vmul.f32 1.0, %v671
  %v673 = vtanh.pop %v653
  %v674 = vmul.f32 %v672, %v606
  %676 = vrot.lane.b32.xlu0 %v673, 32
  %v677 = vpop.permute.xlu0 %676
  %v679 = vmul.f32 %v672, %v677
  %681 = vrot.lane.b32.xlu0 %v679, 32
  %v682 = vpop.permute.xlu0 %681
  %v684 = vadd.f32 %v674, %v682
  %v685 = vtanh.pop %v684
  %687 = vrot.lane.b32.xlu0 %v685, 32
  %v688 = vpop.permute.xlu0 %687
  %v690 = vmul.f32 %v672, %v688
  %v691 = vmul.f32 %v690, %v138
  %693 = vrot.lane.b32.xlu0 %v691, 64
  %v694 = vpop.permute.xlu0 %693
  %v696 = vsel %vm145, %v694, 0.0
  %697 = vadd.xlane.f32.xlu0 %v696
  %v698 = vpop.xlane.xlu0 %697
  %v699 = vadd.f32 %v698, %v149
  %v701 = vperm.slane %v699, %v153
  %703 = vst.msk [vmem:[%s6 + $0x7] sm:$0x1] %vm156, %v701
  // Predicated region
  $region26: #{lstm_net_forward.1} parent=0 // pred_check
    _
  $region27: #{lstm_net_forward.1} parent=0 // pred_check_branch
    %705 = sbr.rel (0) target = $region29
  $region28: #{lstm_net_forward.1} parent=0 // pred_region
    _
  $region29: #{lstm_net_forward.1} parent=0 // pred_fallthru
    _
  // Predicated region
  $region30: #{lstm_net_forward.1} parent=0 // pred_check
    _
  $region31: #{lstm_net_forward.1} parent=0 // pred_check_branch
    %707 = sbr.rel (0) target = $region33
  $region32: #{lstm_net_forward.1} parent=0 // pred_region
    _
  $region33: #{lstm_net_forward.1} parent=0 // pred_fallthru
    _

</llo_original>
